<compile_context>
chip_gen: v7x
topology: tpu7x:2x2x1
jax: 0.10.0
libtpu: 0.0.40
codegen_flags: <defaults>
</compile_context>

<pallas_src>
import functools

import jax
import jax.numpy as jnp
from jax.experimental import pallas as pl
from jax.experimental.pallas import tpu as pltpu

LANE = 128          # TPU lane width (last-dim alignment target)
SUBLANE_BF16 = 16   # bf16 sublane packing
TILE_CAP = 1024     # max batch rows per grid step (VMEM use stays ~0.5 MiB)


def _round_up(n, m):
    return ((n + m - 1) // m) * m


def _cdiv(a, b):
    return -(-a // b)


def mlp_kernel(x_ref,
               w1_ref, b1_ref,
               w2_ref, b2_ref,
               w3_ref, b3_ref,
               w4_ref, b4_ref,
               o_ref, *, out_n):
    # In-kernel f32 -> bf16 cast of the LHS (per perf review: avoids a separate
    # XLA cast op + an extra HBM pass over the input).
    h = x_ref[...].astype(jnp.bfloat16)
    # fc1 + ReLU  (bf16 x bf16 -> f32 accumulate on the MXU; bias/ReLU on f32 VPU)
    h = jnp.dot(h, w1_ref[...], preferred_element_type=jnp.float32)
    h = jnp.maximum(h + b1_ref[...], 0.0).astype(jnp.bfloat16)
    # fc2 + ReLU
    h = jnp.dot(h, w2_ref[...], preferred_element_type=jnp.float32)
    h = jnp.maximum(h + b2_ref[...], 0.0).astype(jnp.bfloat16)
    # fc3 + ReLU
    h = jnp.dot(h, w3_ref[...], preferred_element_type=jnp.float32)
    h = jnp.maximum(h + b3_ref[...], 0.0).astype(jnp.bfloat16)
    # out (no activation): lane-dense matmul, then narrow (out_n-wide) store.
    y = jnp.dot(h, w4_ref[...], preferred_element_type=jnp.float32) + b4_ref[...]
    o_ref[...] = y[:, :out_n].astype(o_ref.dtype)


def init_params(key, seq_length, input_size, output_size):
    """PyTorch-Linear-style init (uniform +-1/sqrt(fan_in)).
    Weights stored pre-transposed as (in_features, out_features); biases (1, out)."""
    dims = [(seq_length * input_size, 320), (320, 80), (80, 40), (40, output_size)]
    params = []
    for (fan_in, fan_out) in dims:
        key, kw, kb = jax.random.split(key, 3)
        bound = 1.0 / jnp.sqrt(fan_in)
        w = jax.random.uniform(kw, (fan_in, fan_out), jnp.float32, -bound, bound)
        b = jax.random.uniform(kb, (1, fan_out), jnp.float32, -bound, bound)
        params.append((w, b))
    return params


def pad_params(params):
    """Zero-pad every layer's output width (and the next layer's input rows)
    up to a multiple of 128 lanes; cast weights to bf16, keep biases f32.
    Padded columns are zero after bias+ReLU and contribute nothing downstream,
    so the math is unchanged (up to f32 summation order).  The kernel stores
    only the first output_size columns of the last layer, so the output is
    never padded in HBM."""
    padded = []
    prev_out_pad = None
    for (w, b) in params:
        fin, fout = w.shape
        fin_pad = fin if prev_out_pad is None else prev_out_pad
        fout_pad = _round_up(fout, LANE)
        w_p = jnp.zeros((fin_pad, fout_pad), jnp.float32).at[:fin, :fout].set(w)
        b_p = jnp.zeros((1, fout_pad), jnp.float32).at[:, :fout].set(b)
        padded.append((w_p.astype(jnp.bfloat16), b_p))
        prev_out_pad = fout_pad
    return padded


@functools.partial(jax.jit, static_argnames=("output_size",))
def mlp_regressor_forward(x, padded_params, output_size):
    """x: (B, seq_length, input_size) float32. Returns (B, output_size) float32."""
    B = x.shape[0]
    x_flat = x.reshape(B, -1)            # nn.Flatten; stays f32 (cast is in-kernel)
    in_feat = x_flat.shape[1]

    (w1, b1), (w2, b2), (w3, b3), (w4, b4) = padded_params

    # Batch tiling: derive tm from the tile count (avoids ~2x zero-row padding),
    # cap rows/tile at TILE_CAP, and keep an even tile count (>=2) when the
    # batch is big enough so both v7x TensorCores get balanced work.
    n_tiles = _cdiv(B, TILE_CAP)
    if B > 2 * SUBLANE_BF16:
        n_tiles = max(n_tiles, 2)
        if n_tiles % 2:
            n_tiles += 1
    tm = _round_up(_cdiv(B, n_tiles), SUBLANE_BF16)
    b_pad = n_tiles * tm
    if b_pad != B:
        x_flat = jnp.pad(x_flat, ((0, b_pad - B), (0, 0)))
    grid = (n_tiles,)

    const2d = lambda i: (0, 0)   # weights/biases resident in VMEM across steps
    kernel = functools.partial(mlp_kernel, out_n=output_size)

    out = pl.pallas_call(
        kernel,
        out_shape=jax.ShapeDtypeStruct((b_pad, output_size), jnp.float32),
        grid=grid,
        in_specs=[
            pl.BlockSpec((tm, in_feat), lambda i: (i, 0)),   # x tile (f32)
            pl.BlockSpec(w1.shape, const2d), pl.BlockSpec(b1.shape, const2d),
            pl.BlockSpec(w2.shape, const2d), pl.BlockSpec(b2.shape, const2d),
            pl.BlockSpec(w3.shape, const2d), pl.BlockSpec(b3.shape, const2d),
            pl.BlockSpec(w4.shape, const2d), pl.BlockSpec(b4.shape, const2d),
        ],
        out_specs=pl.BlockSpec((tm, output_size), lambda i: (i, 0)),
        compiler_params=pltpu.CompilerParams(
            dimension_semantics=("parallel",)),
    )(x_flat, w1, b1, w2, b2, w3, b3, w4, b4)

    return out[:B]


def reference_forward_f32(x, params):
    """Pure-f32 reference matching the PyTorch module exactly."""
    B = x.shape[0]
    h = x.reshape(B, -1)
    (w1, b1), (w2, b2), (w3, b3), (w4, b4) = params
    h = jnp.maximum(h @ w1 + b1, 0.0)
    h = jnp.maximum(h @ w2 + b2, 0.0)
    h = jnp.maximum(h @ w3 + b3, 0.0)
    return h @ w4 + b4


def reference_forward_bf16(x, params):
    """Reference with the same precision recipe as the kernel
    (bf16 operands, f32 accumulation, f32 bias/ReLU)."""
    B = x.shape[0]
    h = x.reshape(B, -1).astype(jnp.bfloat16)
    n = len(params)
    for idx, (w, b) in enumerate(params):
        y = jnp.dot(h, w.astype(jnp.bfloat16),
                    preferred_element_type=jnp.float32) + b
        if idx < n - 1:
            h = jnp.maximum(y, 0.0).astype(jnp.bfloat16)
        else:
            h = y
    return h


if __name__ == "__main__":
    # Small shapes consistent with the module's forward.
    batch = 2
    seq_length = 8
    input_size = 4
    output_size = 1

    key = jax.random.PRNGKey(0)
    key, kx = jax.random.split(key)
    x = jax.random.normal(kx, (batch, seq_length, input_size), jnp.float32)

    params = init_params(key, seq_length, input_size, output_size)
    padded_params = pad_params(params)

    out = mlp_regressor_forward(x, padded_params, output_size)
    out = jax.block_until_ready(out)
    assert out.shape == (batch, output_size)

    # Tight check against a precision-matched (bf16 matmul, f32 accum) reference.
    ref_bf16 = reference_forward_bf16(x, params)
    assert jnp.allclose(out, ref_bf16, atol=1e-4, rtol=1e-4), \
        f"mismatch vs bf16 reference: {out} vs {ref_bf16}"

    # Loose check against the exact f32 PyTorch-semantics reference.
    # TODO(synk): bf16 weights are a documented precision contract; keep fc1 in
    # f32 if tighter fidelity to the f32 PyTorch module is ever required.
    ref_f32 = reference_forward_f32(x, params)
    assert jnp.allclose(out, ref_f32, atol=5e-2, rtol=5e-2), \
        f"mismatch vs f32 reference: {out} vs {ref_f32}"

    print("KERNEL_OK")
</pallas_src>

<mosaic_0001>
module attributes {stable_mosaic.version = 11 : i64} {
  func.func @mlp_kernel(%arg0: i32, %arg1: memref<16x32xf32, #tpu.memory_space<vmem>>, %arg2: memref<32x384xbf16, #tpu.memory_space<vmem>>, %arg3: memref<1x384xf32, #tpu.memory_space<vmem>>, %arg4: memref<384x128xbf16, #tpu.memory_space<vmem>>, %arg5: memref<1x128xf32, #tpu.memory_space<vmem>>, %arg6: memref<128x128xbf16, #tpu.memory_space<vmem>>, %arg7: memref<1x128xf32, #tpu.memory_space<vmem>>, %arg8: memref<128x128xbf16, #tpu.memory_space<vmem>>, %arg9: memref<1x128xf32, #tpu.memory_space<vmem>>, %arg10: memref<16x1xf32, #tpu.memory_space<vmem>>) attributes {dimension_semantics = [#tpu.dimension_semantics<parallel>], iteration_bounds = array<i64: 1>, scalar_prefetch = 0 : i64, scratch_operands = 0 : i64, tpu.core_type = #tpu.core_type<tc>, window_params = [{transform_indices = @transform_0, window_bounds = array<i64: 16, 32>}, {pipeline_mode = #tpu.pipeline_mode<synchronous>, transform_indices = @transform_1, window_bounds = array<i64: 32, 384>}, {pipeline_mode = #tpu.pipeline_mode<synchronous>, transform_indices = @transform_2, window_bounds = array<i64: 1, 384>}, {pipeline_mode = #tpu.pipeline_mode<synchronous>, transform_indices = @transform_3, window_bounds = array<i64: 384, 128>}, {pipeline_mode = #tpu.pipeline_mode<synchronous>, transform_indices = @transform_4, window_bounds = array<i64: 1, 128>}, {pipeline_mode = #tpu.pipeline_mode<synchronous>, transform_indices = @transform_5, window_bounds = array<i64: 128, 128>}, {pipeline_mode = #tpu.pipeline_mode<synchronous>, transform_indices = @transform_6, window_bounds = array<i64: 1, 128>}, {pipeline_mode = #tpu.pipeline_mode<synchronous>, transform_indices = @transform_7, window_bounds = array<i64: 128, 128>}, {pipeline_mode = #tpu.pipeline_mode<synchronous>, transform_indices = @transform_8, window_bounds = array<i64: 1, 128>}, {transform_indices = @transform_9, window_bounds = array<i64: 16, 1>}]} {
    %c0 = arith.constant 0 : index
    %c0_0 = arith.constant 0 : index
    %0 = vector.load %arg1[%c0, %c0_0] : memref<16x32xf32, #tpu.memory_space<vmem>>, vector<16x32xf32>
    %1 = arith.truncf %0 : vector<16x32xf32> to vector<16x32xbf16>
    %c0_1 = arith.constant 0 : index
    %c0_2 = arith.constant 0 : index
    %2 = vector.load %arg2[%c0_1, %c0_2] : memref<32x384xbf16, #tpu.memory_space<vmem>>, vector<32x384xbf16>
    %cst = arith.constant dense<0.000000e+00> : vector<16x384xf32>
    %3 = tpu.matmul %1, %2, %cst {dimension_numbers = #tpu.dot_dimension_numbers<[1], [0], [0], [1], [0, 0, 1, 1], [], []>} : vector<16x32xbf16>, vector<32x384xbf16>, vector<16x384xf32> -> vector<16x384xf32>
    %c0_3 = arith.constant 0 : index
    %c0_4 = arith.constant 0 : index
    %4 = vector.load %arg3[%c0_3, %c0_4] : memref<1x384xf32, #tpu.memory_space<vmem>>, vector<1x384xf32>
    %5 = vector.broadcast %4 : vector<1x384xf32> to vector<16x384xf32>
    %6 = arith.addf %3, %5 : vector<16x384xf32>
    %cst_5 = arith.constant 0.000000e+00 : f32
    %7 = vector.broadcast %cst_5 : f32 to vector<16x384xf32>
    %8 = arith.maximumf %6, %7 : vector<16x384xf32>
    %9 = arith.truncf %8 : vector<16x384xf32> to vector<16x384xbf16>
    %c0_6 = arith.constant 0 : index
    %c0_7 = arith.constant 0 : index
    %10 = vector.load %arg4[%c0_6, %c0_7] : memref<384x128xbf16, #tpu.memory_space<vmem>>, vector<384x128xbf16>
    %cst_8 = arith.constant dense<0.000000e+00> : vector<16x128xf32>
    %11 = tpu.matmul %9, %10, %cst_8 {dimension_numbers = #tpu.dot_dimension_numbers<[1], [0], [0], [1], [0, 0, 1, 1], [], []>} : vector<16x384xbf16>, vector<384x128xbf16>, vector<16x128xf32> -> vector<16x128xf32>
    %c0_9 = arith.constant 0 : index
    %c0_10 = arith.constant 0 : index
    %12 = vector.load %arg5[%c0_9, %c0_10] : memref<1x128xf32, #tpu.memory_space<vmem>>, vector<1x128xf32>
    %13 = vector.broadcast %12 : vector<1x128xf32> to vector<16x128xf32>
    %14 = arith.addf %11, %13 : vector<16x128xf32>
    %cst_11 = arith.constant 0.000000e+00 : f32
    %15 = vector.broadcast %cst_11 : f32 to vector<16x128xf32>
    %16 = arith.maximumf %14, %15 : vector<16x128xf32>
    %17 = arith.truncf %16 : vector<16x128xf32> to vector<16x128xbf16>
    %c0_12 = arith.constant 0 : index
    %c0_13 = arith.constant 0 : index
    %18 = vector.load %arg6[%c0_12, %c0_13] : memref<128x128xbf16, #tpu.memory_space<vmem>>, vector<128x128xbf16>
    %cst_14 = arith.constant dense<0.000000e+00> : vector<16x128xf32>
    %19 = tpu.matmul %17, %18, %cst_14 {dimension_numbers = #tpu.dot_dimension_numbers<[1], [0], [0], [1], [0, 0, 1, 1], [], []>} : vector<16x128xbf16>, vector<128x128xbf16>, vector<16x128xf32> -> vector<16x128xf32>
    %c0_15 = arith.constant 0 : index
    %c0_16 = arith.constant 0 : index
    %20 = vector.load %arg7[%c0_15, %c0_16] : memref<1x128xf32, #tpu.memory_space<vmem>>, vector<1x128xf32>
    %21 = vector.broadcast %20 : vector<1x128xf32> to vector<16x128xf32>
    %22 = arith.addf %19, %21 : vector<16x128xf32>
    %cst_17 = arith.constant 0.000000e+00 : f32
    %23 = vector.broadcast %cst_17 : f32 to vector<16x128xf32>
    %24 = arith.maximumf %22, %23 : vector<16x128xf32>
    %25 = arith.truncf %24 : vector<16x128xf32> to vector<16x128xbf16>
    %c0_18 = arith.constant 0 : index
    %c0_19 = arith.constant 0 : index
    %26 = vector.load %arg8[%c0_18, %c0_19] : memref<128x128xbf16, #tpu.memory_space<vmem>>, vector<128x128xbf16>
    %cst_20 = arith.constant dense<0.000000e+00> : vector<16x128xf32>
    %27 = tpu.matmul %25, %26, %cst_20 {dimension_numbers = #tpu.dot_dimension_numbers<[1], [0], [0], [1], [0, 0, 1, 1], [], []>} : vector<16x128xbf16>, vector<128x128xbf16>, vector<16x128xf32> -> vector<16x128xf32>
    %c0_21 = arith.constant 0 : index
    %c0_22 = arith.constant 0 : index
    %28 = vector.load %arg9[%c0_21, %c0_22] : memref<1x128xf32, #tpu.memory_space<vmem>>, vector<1x128xf32>
    %29 = vector.broadcast %28 : vector<1x128xf32> to vector<16x128xf32>
    %30 = arith.addf %27, %29 : vector<16x128xf32>
    %31 = vector.extract_strided_slice %30 {offsets = [0, 0], sizes = [16, 1], strides = [1, 1]} : vector<16x128xf32> to vector<16x1xf32>
    %c0_23 = arith.constant 0 : index
    %c0_24 = arith.constant 0 : index
    %32 = vector.load %arg10[%c0_23, %c0_24] : memref<16x1xf32, #tpu.memory_space<vmem>>, vector<16x1xf32>
    tpu.vector_store %arg10[%c0_23, %c0_24], %31 {strides = array<i32>} : memref<16x1xf32, #tpu.memory_space<vmem>>, vector<16x1xf32>,
    return
  }
  func.func @transform_0(%arg0: i32) -> (i32, i32) {
    %c0_i32 = arith.constant 0 : i32
    %c0_i32_0 = arith.constant 0 : i32
    return %arg0, %c0_i32 : i32, i32
  }
  func.func @transform_1(%arg0: i32) -> (i32, i32) {
    %c0_i32 = arith.constant 0 : i32
    %c0_i32_0 = arith.constant 0 : i32
    %c0_i32_1 = arith.constant 0 : i32
    return %c0_i32, %c0_i32_0 : i32, i32
  }
  func.func @transform_2(%arg0: i32) -> (i32, i32) {
    %c0_i32 = arith.constant 0 : i32
    %c0_i32_0 = arith.constant 0 : i32
    %c0_i32_1 = arith.constant 0 : i32
    return %c0_i32, %c0_i32_0 : i32, i32
  }
  func.func @transform_3(%arg0: i32) -> (i32, i32) {
    %c0_i32 = arith.constant 0 : i32
    %c0_i32_0 = arith.constant 0 : i32
    %c0_i32_1 = arith.constant 0 : i32
    return %c0_i32, %c0_i32_0 : i32, i32
  }
  func.func @transform_4(%arg0: i32) -> (i32, i32) {
    %c0_i32 = arith.constant 0 : i32
    %c0_i32_0 = arith.constant 0 : i32
    %c0_i32_1 = arith.constant 0 : i32
    return %c0_i32, %c0_i32_0 : i32, i32
  }
  func.func @transform_5(%arg0: i32) -> (i32, i32) {
    %c0_i32 = arith.constant 0 : i32
    %c0_i32_0 = arith.constant 0 : i32
    %c0_i32_1 = arith.constant 0 : i32
    return %c0_i32, %c0_i32_0 : i32, i32
  }
  func.func @transform_6(%arg0: i32) -> (i32, i32) {
    %c0_i32 = arith.constant 0 : i32
    %c0_i32_0 = arith.constant 0 : i32
    %c0_i32_1 = arith.constant 0 : i32
    return %c0_i32, %c0_i32_0 : i32, i32
  }
  func.func @transform_7(%arg0: i32) -> (i32, i32) {
    %c0_i32 = arith.constant 0 : i32
    %c0_i32_0 = arith.constant 0 : i32
    %c0_i32_1 = arith.constant 0 : i32
    return %c0_i32, %c0_i32_0 : i32, i32
  }
  func.func @transform_8(%arg0: i32) -> (i32, i32) {
    %c0_i32 = arith.constant 0 : i32
    %c0_i32_0 = arith.constant 0 : i32
    %c0_i32_1 = arith.constant 0 : i32
    return %c0_i32, %c0_i32_0 : i32, i32
  }
  func.func @transform_9(%arg0: i32) -> (i32, i32) {
    %c0_i32 = arith.constant 0 : i32
    %c0_i32_0 = arith.constant 0 : i32
    return %arg0, %c0_i32 : i32, i32
  }
}

</mosaic_0001>

<llo_original>
// kernel: mlp_regressor_forward.1
$region0: #{mlp_regressor_forward.1}
  #allocation0 [shape = 'u32[]', space=smem, size = 0x4, offset = 0x4, fixed_abs, tag = 'smem constant byte address 0x4 - core index']
  #allocation1 [shape = 'u32[144,128]{1,0:T(1,128)}', space=vmem, size = 0x12000, scoped, tag = 'internal scratch']
  %s0 = inlined_call_operand.vmem [shape: f32[16,32], index: 0, kind: input, shape index: {}]
  %s1 = inlined_call_operand.hbm [shape: bf16[32,384], index: 1, kind: input, shape index: {}]
  %s2 = inlined_call_operand.vmem [shape: f32[1,384], index: 2, kind: input, shape index: {}]
  %s3 = inlined_call_operand.hbm [shape: bf16[384,128], index: 3, kind: input, shape index: {}]
  %s4 = inlined_call_operand.vmem [shape: f32[1,128], index: 4, kind: input, shape index: {}]
  %s5 = inlined_call_operand.vmem [shape: bf16[128,128], index: 5, kind: input, shape index: {}]
  %s6 = inlined_call_operand.vmem [shape: f32[1,128], index: 6, kind: input, shape index: {}]
  %s7 = inlined_call_operand.hbm [shape: bf16[128,128], index: 7, kind: input, shape index: {}]
  %s8 = inlined_call_operand.vmem [shape: f32[1,128], index: 8, kind: input, shape index: {}]
  %s9 = inlined_call_operand.vmem [shape: f32[16,1], index: 9, kind: output, shape index: {}]
  %s10 = sld [smem:[#allocation0]]
  $region58: #{mlp_regressor_forward.1} parent=0
    _
  %s12 = ssub.s32 1, %s10
  %s13 = scalar_select 0, %s12, %s10
  $region1: #{mlp_regressor_forward.1} parent=0
    #allocation2 [shape = 'u8[24576]{0}', space=vmem, size = 0x6000, scoped, tag = 'input window, operand 1, single buffered']
    #allocation3 [shape = 's32[1]{0}', space=sflag, size = 0x4, scoped, tag = 'scoped memory for mlp_regressor_forward.1']
    #allocation4 [shape = 'u8[98304]{0}', space=vmem, size = 0x18000, scoped, tag = 'input window, operand 3, single buffered']
    #allocation5 [shape = 's32[1]{0}', space=sflag, size = 0x4, scoped, tag = 'scoped memory for mlp_regressor_forward.1']
    #allocation6 [shape = 'u8[32768]{0}', space=vmem, size = 0x8000, scoped, tag = 'input window, operand 7, single buffered']
    %14 = vsyncpa [#allocation3], 0
    %15 = vsyncpa [#allocation5], 0
    // Predicated region
    $region2: #{mlp_regressor_forward.1} parent=1 // pred_check
      _
    $region3: #{mlp_regressor_forward.1} parent=1 // pred_check_branch
      %17 = sbr.rel (0) target = $region5
    $region4: #{mlp_regressor_forward.1} parent=1 // pred_region
      _
    $region5: #{mlp_regressor_forward.1} parent=1 // pred_fallthru
      _
    // Predicated region
    $region6: #{mlp_regressor_forward.1} parent=1 // pred_check
      _
    $region7: #{mlp_regressor_forward.1} parent=1 // pred_check_branch
      %19 = sbr.rel (0) target = $region9
    $region8: #{mlp_regressor_forward.1} parent=1 // pred_region
      %s21 = ssub.s32 768, 768
      %22 = vsyncadd [#allocation3], %s21
      %s23 = sshll.u32 [#allocation2], 4
      %s24 = int_to_ptr.vmem [resolvable:$true] %s23
      %29 = dma.hbm_to_vmem [thread:$0]  %s1, 768, %s24, [#allocation3], 192, 192, 12
    $region9: #{mlp_regressor_forward.1} parent=1 // pred_fallthru
      _
    // Predicated region
    $region10: #{mlp_regressor_forward.1} parent=1 // pred_check
      _
    $region11: #{mlp_regressor_forward.1} parent=1 // pred_check_branch
      %31 = sbr.rel (0) target = $region13
    $region12: #{mlp_regressor_forward.1} parent=1 // pred_region
      _
    $region13: #{mlp_regressor_forward.1} parent=1 // pred_fallthru
      _
    // Predicated region
    $region14: #{mlp_regressor_forward.1} parent=1 // pred_check
      _
    $region15: #{mlp_regressor_forward.1} parent=1 // pred_check_branch
      %33 = sbr.rel (0) target = $region17
    $region16: #{mlp_regressor_forward.1} parent=1 // pred_region
      %s35 = ssub.s32 3072, 3072
      %36 = vsyncadd [#allocation5], %s35
      %s37 = sshll.u32 [#allocation4], 4
      %s38 = int_to_ptr.vmem [resolvable:$true] %s37
      %43 = dma.hbm_to_vmem [thread:$0]  %s3, 3072, %s38, [#allocation5], 64, 64, 4
    $region17: #{mlp_regressor_forward.1} parent=1 // pred_fallthru
      _
    // Predicated region
    $region18: #{mlp_regressor_forward.1} parent=1 // pred_check
      _
    $region19: #{mlp_regressor_forward.1} parent=1 // pred_check_branch
      %45 = sbr.rel (0) target = $region21
    $region20: #{mlp_regressor_forward.1} parent=1 // pred_region
      _
    $region21: #{mlp_regressor_forward.1} parent=1 // pred_fallthru
      _
    // Predicated region
    $region22: #{mlp_regressor_forward.1} parent=1 // pred_check
      _
    $region23: #{mlp_regressor_forward.1} parent=1 // pred_check_branch
      %47 = sbr.rel (0) target = $region25
    $region24: #{mlp_regressor_forward.1} parent=1 // pred_region
      _
    $region25: #{mlp_regressor_forward.1} parent=1 // pred_fallthru
      _
    // Predicated region
    $region26: #{mlp_regressor_forward.1} parent=1 // pred_check
      _
    $region27: #{mlp_regressor_forward.1} parent=1 // pred_check_branch
      %49 = sbr.rel (0) target = $region29
    $region28: #{mlp_regressor_forward.1} parent=1 // pred_region
      _
    $region29: #{mlp_regressor_forward.1} parent=1 // pred_fallthru
      _
    // Predicated region
    $region30: #{mlp_regressor_forward.1} parent=1 // pred_check
      _
    $region31: #{mlp_regressor_forward.1} parent=1 // pred_check_branch
      %51 = sbr.rel (0) target = $region33
    $region32: #{mlp_regressor_forward.1} parent=1 // pred_region
      %s53 = ssub.s32 1024, 1024
      %54 = vsyncadd [#allocation5], %s53
      %s55 = sshll.u32 [#allocation6], 4
      %s56 = int_to_ptr.vmem [resolvable:$true] %s55
      %61 = dma.hbm_to_vmem [thread:$0]  %s7, 1024, %s56, [#allocation5], 64, 64, 4
    $region33: #{mlp_regressor_forward.1} parent=1 // pred_fallthru
      _
    // Predicated region
    $region34: #{mlp_regressor_forward.1} parent=1 // pred_check
      _
    $region35: #{mlp_regressor_forward.1} parent=1 // pred_check_branch
      %63 = sbr.rel (0) target = $region37
    $region36: #{mlp_regressor_forward.1} parent=1 // pred_region
      _
    $region37: #{mlp_regressor_forward.1} parent=1 // pred_fallthru
      _
    // Predicated region
    $region38: #{mlp_regressor_forward.1} parent=1 // pred_check
      _
    $region39: #{mlp_regressor_forward.1} parent=1 // pred_check_branch
      %65 = sbr.rel (0) target = $region41
    $region40: #{mlp_regressor_forward.1} parent=1 // pred_region
      %66 = dma.done [#allocation3], 768
    $region41: #{mlp_regressor_forward.1} parent=1 // pred_fallthru
      _
    // Predicated region
    $region42: #{mlp_regressor_forward.1} parent=1 // pred_check
      _
    $region43: #{mlp_regressor_forward.1} parent=1 // pred_check_branch
      %68 = sbr.rel (0) target = $region45
    $region44: #{mlp_regressor_forward.1} parent=1 // pred_region
      %69 = dma.done [#allocation5], 3072
    $region45: #{mlp_regressor_forward.1} parent=1 // pred_fallthru
      _
    // Predicated region
    $region46: #{mlp_regressor_forward.1} parent=1 // pred_check
      _
    $region47: #{mlp_regressor_forward.1} parent=1 // pred_check_branch
      %71 = sbr.rel (0) target = $region49
    $region48: #{mlp_regressor_forward.1} parent=1 // pred_region
      %72 = dma.done [#allocation5], 1024
    $region49: #{mlp_regressor_forward.1} parent=1 // pred_fallthru
      _
    %v74 = vld [vmem:[%s0] sm:$0xff]
    %v75 = vld [vmem:[%s0 + $0x8] sm:$0xff]
    %v76 = vpack.c.bf16 %v75, %v74
    %v77 = vld [vmem:[#allocation2] sm:$0xff]
    %v78 = vld [vmem:[#allocation2 + $0x8] sm:$0xf]
    %v79 = vld [vmem:[#allocation2 + $0xc] sm:$0xff]
    %v80 = vld [vmem:[#allocation2 + $0x14] sm:$0xf]
    %v81 = vld [vmem:[#allocation2 + $0x18] sm:$0xff]
    %v82 = vld [vmem:[#allocation2 + $0x20] sm:$0xf]
    %v83 = vld [vmem:[#allocation2 + $0x24] sm:$0xff]
    %v84 = vld [vmem:[#allocation2 + $0x2c] sm:$0xf]
    %v85 = vld [vmem:[%s2] sm:$0x7]
    %v87 = vlaneseq
    %v88 = vshrl.u32 %v87, 7
    %v89 = vsub.s32 0, %v88
    %v90 = vrot.slane %v85, %v89
    %v91 = vlaneseq
    %v92 = vshrl.u32 %v91, 7
    %v93 = vsub.s32 1, %v92
    %v94 = vrot.slane %v85, %v93
    %v95 = vlaneseq
    %v96 = vshrl.u32 %v95, 7
    %v97 = vsub.s32 2, %v96
    %v98 = vrot.slane %v85, %v97
    %v110 = vunpack.c.l.b16 %v77
    %v111 = vunpack.c.h.b16 %v77
    %v112 = vunpack.c.l.b16 %v78
    %v113 = vunpack.c.l.b16 %v79
    %v114 = vunpack.c.h.b16 %v79
    %v115 = vunpack.c.l.b16 %v80
    %v116 = vunpack.c.l.b16 %v81
    %v117 = vunpack.c.h.b16 %v81
    %v118 = vunpack.c.l.b16 %v82
    %v119 = vunpack.c.l.b16 %v83
    %v120 = vunpack.c.h.b16 %v83
    %v121 = vunpack.c.l.b16 %v84
    %v122 = vpack.c.b16 %v113, %v110
    %v123 = vpack.c.b16 %v114, %v111
    %v124 = vpack.c.b16 %v115, %v112
    %v125 = vpack.c.b16 %v119, %v116
    %v126 = vpack.c.b16 %v120, %v117
    %v127 = vpack.c.b16 %v121, %v118
    %vm134 = vcmask 261120
    %v136 = vsel %vm134, %v76, 0
    %138 = vmatprep.subr.bf16.mxu0 %v123
    %139 = vmatpush1.bf16.msra.mxu0 %v122
    %140 = vmatprep.subr.bf16.mxu0 %v126
    %141 = vmatpush1.bf16.msra.mxu0 %v125
    %142 = vmatprep.subr.bf16.mxu0 0
    %143 = vmatpush1.bf16.msra.mxu0 0
    %144 = vmatprep.subr.bf16.mxu0 0
    %145 = vmatpush1.bf16.msra.mxu0 0
    %146 = vmatprep.subr.bf16.mxu0 0
    %147 = vmatpush1.bf16.msra.mxu0 0
    %148 = vmatprep.subr.bf16.mxu0 0
    %149 = vmatpush1.bf16.msra.mxu0 0
    %150 = vmatprep.subr.bf16.mxu0 0
    %151 = vmatpush1.bf16.msra.mxu0 0
    %152 = vmatprep.subr.bf16.mxu0 0
    %153 = vmatpush1.bf16.msra.mxu0 0
    %154 = vmatprep.subr.bf16.mxu0 0
    %155 = vmatpush1.bf16.msra.mxu0 0
    %156 = vmatprep.subr.bf16.mxu0 0
    %157 = vmatpush1.bf16.msra.mxu0 0
    %158 = vmatprep.subr.bf16.mxu0 0
    %159 = vmatpush1.bf16.msra.mxu0 0
    %160 = vmatprep.subr.bf16.mxu0 0
    %161 = vmatpush1.bf16.msra.mxu0 0
    %162 = vmatprep.subr.bf16.mxu0 0
    %163 = vmatpush1.bf16.msra.mxu0 0
    %164 = vmatprep.subr.bf16.mxu0 0
    %165 = vmatpush1.bf16.msra.mxu0 0
    %166 = vmatprep.subr.bf16.mxu0 0
    %167 = vmatpush1.bf16.msra.mxu0 0
    %168 = vmatprep.subr.bf16.mxu0 0
    %169 = vmatpush1.bf16.msra.mxu0 0
    %170 = vmatprep.mubr.bf16.mxu0 0
    %171 = vmatmul.mubr.bf16.gmra.mrb[0].mxu0 %v136
    %v172 = vpop.f32.mrb[0].mxu0
    %v173 = vadd.f32 %v90, %v172
    %v174 = vpop.f32.mrb[0].mxu0
    %v175 = vadd.f32 %v94, %v174
    %v176 = vpop.f32.mrb[0].mxu0
    %v177 = vadd.f32 %v90, %v176
    %v178 = vpop.f32.mrb[0].mxu0
    %v179 = vadd.f32 %v94, %v178
    %180 = vdwg.mxu0
    %181 = vmatprep.subr.bf16.mxu0 0
    %182 = vmatpush1.bf16.msra.mxu0 %v124
    %183 = vmatprep.subr.bf16.mxu0 0
    %184 = vmatpush1.bf16.msra.mxu0 %v127
    %185 = vmatprep.subr.bf16.mxu0 0
    %186 = vmatpush1.bf16.msra.mxu0 0
    %187 = vmatprep.subr.bf16.mxu0 0
    %188 = vmatpush1.bf16.msra.mxu0 0
    %189 = vmatprep.subr.bf16.mxu0 0
    %190 = vmatpush1.bf16.msra.mxu0 0
    %191 = vmatprep.subr.bf16.mxu0 0
    %192 = vmatpush1.bf16.msra.mxu0 0
    %193 = vmatprep.subr.bf16.mxu0 0
    %194 = vmatpush1.bf16.msra.mxu0 0
    %195 = vmatprep.subr.bf16.mxu0 0
    %196 = vmatpush1.bf16.msra.mxu0 0
    %197 = vmatprep.subr.bf16.mxu0 0
    %198 = vmatpush1.bf16.msra.mxu0 0
    %199 = vmatprep.subr.bf16.mxu0 0
    %200 = vmatpush1.bf16.msra.mxu0 0
    %201 = vmatprep.subr.bf16.mxu0 0
    %202 = vmatpush1.bf16.msra.mxu0 0
    %203 = vmatprep.subr.bf16.mxu0 0
    %204 = vmatpush1.bf16.msra.mxu0 0
    %205 = vmatprep.subr.bf16.mxu0 0
    %206 = vmatpush1.bf16.msra.mxu0 0
    %207 = vmatprep.subr.bf16.mxu0 0
    %208 = vmatpush1.bf16.msra.mxu0 0
    %209 = vmatprep.subr.bf16.mxu0 0
    %210 = vmatpush1.bf16.msra.mxu0 0
    %211 = vmatprep.subr.bf16.mxu0 0
    %212 = vmatpush1.bf16.msra.mxu0 0
    %213 = vmatprep.mubr.bf16.mxu0 0
    %214 = vmatmul.mubr.bf16.gmra.mrb[0].mxu0 %v136
    %v215 = vpop.f32.mrb[0].mxu0
    %v216 = vadd.f32 %v98, %v215
    %v217 = vpop.f32.mrb[0].mxu0
    %v218 = vpop.f32.mrb[0].mxu0
    %v219 = vadd.f32 %v98, %v218
    %v220 = vpop.f32.mrb[0].mxu0
    %221 = vdwg.mxu0
    %v222 = vmax.f32 %v173, 0.0
    %v223 = vmax.f32 %v175, 0.0
    %v224 = vmax.f32 %v216, 0.0
    %v225 = vmax.f32 %v177, 0.0
    %v226 = vmax.f32 %v179, 0.0
    %v227 = vmax.f32 %v219, 0.0
    %v228 = vpack.c.bf16 %v225, %v222
    %v229 = vpack.c.bf16 %v226, %v223
    %v230 = vpack.c.bf16 %v227, %v224
    %v231 = vld [vmem:[#allocation4] sm:$0xf]
    %v232 = vld [vmem:[#allocation4 + $0x4] sm:$0xf]
    %v233 = vld [vmem:[#allocation4 + $0x8] sm:$0xf]
    %v234 = vld [vmem:[#allocation4 + $0xc] sm:$0xf]
    %v235 = vld [vmem:[#allocation4 + $0x10] sm:$0xf]
    %v236 = vld [vmem:[#allocation4 + $0x14] sm:$0xf]
    %v237 = vld [vmem:[#allocation4 + $0x18] sm:$0xf]
    %v238 = vld [vmem:[#allocation4 + $0x1c] sm:$0xf]
    %v239 = vld [vmem:[#allocation4 + $0x20] sm:$0xf]
    %v240 = vld [vmem:[#allocation4 + $0x24] sm:$0xf]
    %v241 = vld [vmem:[#allocation4 + $0x28] sm:$0xf]
    %v242 = vld [vmem:[#allocation4 + $0x2c] sm:$0xf]
    %v243 = vld [vmem:[#allocation4 + $0x30] sm:$0xf]
    %v244 = vld [vmem:[#allocation4 + $0x34] sm:$0xf]
    %v245 = vld [vmem:[#allocation4 + $0x38] sm:$0xf]
    %v246 = vld [vmem:[#allocation4 + $0x3c] sm:$0xf]
    %v247 = vld [vmem:[#allocation4 + $0x40] sm:$0xf]
    %v248 = vld [vmem:[#allocation4 + $0x44] sm:$0xf]
    %v249 = vld [vmem:[#allocation4 + $0x48] sm:$0xf]
    %v250 = vld [vmem:[#allocation4 + $0x4c] sm:$0xf]
    %v251 = vld [vmem:[#allocation4 + $0x50] sm:$0xf]
    %v252 = vld [vmem:[#allocation4 + $0x54] sm:$0xf]
    %v253 = vld [vmem:[#allocation4 + $0x58] sm:$0xf]
    %v254 = vld [vmem:[#allocation4 + $0x5c] sm:$0xf]
    %v255 = vld [vmem:[#allocation4 + $0x60] sm:$0xf]
    %v256 = vld [vmem:[#allocation4 + $0x64] sm:$0xf]
    %v257 = vld [vmem:[#allocation4 + $0x68] sm:$0xf]
    %v258 = vld [vmem:[#allocation4 + $0x6c] sm:$0xf]
    %v259 = vld [vmem:[#allocation4 + $0x70] sm:$0xf]
    %v260 = vld [vmem:[#allocation4 + $0x74] sm:$0xf]
    %v261 = vld [vmem:[#allocation4 + $0x78] sm:$0xf]
    %v262 = vld [vmem:[#allocation4 + $0x7c] sm:$0xf]
    %v263 = vld [vmem:[#allocation4 + $0x80] sm:$0xf]
    %v264 = vld [vmem:[#allocation4 + $0x84] sm:$0xf]
    %v265 = vld [vmem:[#allocation4 + $0x88] sm:$0xf]
    %v266 = vld [vmem:[#allocation4 + $0x8c] sm:$0xf]
    %v267 = vld [vmem:[#allocation4 + $0x90] sm:$0xf]
    %v268 = vld [vmem:[#allocation4 + $0x94] sm:$0xf]
    %v269 = vld [vmem:[#allocation4 + $0x98] sm:$0xf]
    %v270 = vld [vmem:[#allocation4 + $0x9c] sm:$0xf]
    %v271 = vld [vmem:[#allocation4 + $0xa0] sm:$0xf]
    %v272 = vld [vmem:[#allocation4 + $0xa4] sm:$0xf]
    %v273 = vld [vmem:[#allocation4 + $0xa8] sm:$0xf]
    %v274 = vld [vmem:[#allocation4 + $0xac] sm:$0xf]
    %v275 = vld [vmem:[#allocation4 + $0xb0] sm:$0xf]
    %v276 = vld [vmem:[#allocation4 + $0xb4] sm:$0xf]
    %v277 = vld [vmem:[#allocation4 + $0xb8] sm:$0xf]
    %v278 = vld [vmem:[#allocation4 + $0xbc] sm:$0xf]
    %v279 = vld [vmem:[%s4] sm:$0x1]
    %v281 = vlaneseq
    %v282 = vshrl.u32 %v281, 7
    %v283 = vsub.s32 0, %v282
    %v284 = vrot.slane %v279, %v283
    %v334 = vunpack.c.l.b16 %v231
    %v335 = vunpack.c.l.b16 %v232
    %v336 = vunpack.c.l.b16 %v233
    %v337 = vunpack.c.l.b16 %v234
    %v338 = vunpack.c.l.b16 %v235
    %v339 = vunpack.c.l.b16 %v236
    %v340 = vunpack.c.l.b16 %v237
    %v341 = vunpack.c.l.b16 %v238
    %v342 = vunpack.c.l.b16 %v239
    %v343 = vunpack.c.l.b16 %v240
    %v344 = vunpack.c.l.b16 %v241
    %v345 = vunpack.c.l.b16 %v242
    %v346 = vunpack.c.l.b16 %v243
    %v347 = vunpack.c.l.b16 %v244
    %v348 = vunpack.c.l.b16 %v245
    %v349 = vunpack.c.l.b16 %v246
    %v350 = vunpack.c.l.b16 %v247
    %v351 = vunpack.c.l.b16 %v248
    %v352 = vunpack.c.l.b16 %v249
    %v353 = vunpack.c.l.b16 %v250
    %v354 = vunpack.c.l.b16 %v251
    %v355 = vunpack.c.l.b16 %v252
    %v356 = vunpack.c.l.b16 %v253
    %v357 = vunpack.c.l.b16 %v254
    %v358 = vunpack.c.l.b16 %v255
    %v359 = vunpack.c.l.b16 %v256
    %v360 = vunpack.c.l.b16 %v257
    %v361 = vunpack.c.l.b16 %v258
    %v362 = vunpack.c.l.b16 %v259
    %v363 = vunpack.c.l.b16 %v260
    %v364 = vunpack.c.l.b16 %v261
    %v365 = vunpack.c.l.b16 %v262
    %v366 = vunpack.c.l.b16 %v263
    %v367 = vunpack.c.l.b16 %v264
    %v368 = vunpack.c.l.b16 %v265
    %v369 = vunpack.c.l.b16 %v266
    %v370 = vunpack.c.l.b16 %v267
    %v371 = vunpack.c.l.b16 %v268
    %v372 = vunpack.c.l.b16 %v269
    %v373 = vunpack.c.l.b16 %v270
    %v374 = vunpack.c.l.b16 %v271
    %v375 = vunpack.c.l.b16 %v272
    %v376 = vunpack.c.l.b16 %v273
    %v377 = vunpack.c.l.b16 %v274
    %v378 = vunpack.c.l.b16 %v275
    %v379 = vunpack.c.l.b16 %v276
    %v380 = vunpack.c.l.b16 %v277
    %v381 = vunpack.c.l.b16 %v278
    %v382 = vpack.c.b16 %v335, %v334
    %v383 = vpack.c.b16 %v337, %v336
    %v384 = vpack.c.b16 %v339, %v338
    %v385 = vpack.c.b16 %v341, %v340
    %v386 = vpack.c.b16 %v343, %v342
    %v387 = vpack.c.b16 %v345, %v344
    %v388 = vpack.c.b16 %v347, %v346
    %v389 = vpack.c.b16 %v349, %v348
    %v390 = vpack.c.b16 %v351, %v350
    %v391 = vpack.c.b16 %v353, %v352
    %v392 = vpack.c.b16 %v355, %v354
    %v393 = vpack.c.b16 %v357, %v356
    %v394 = vpack.c.b16 %v359, %v358
    %v395 = vpack.c.b16 %v361, %v360
    %v396 = vpack.c.b16 %v363, %v362
    %v397 = vpack.c.b16 %v365, %v364
    %v398 = vpack.c.b16 %v367, %v366
    %v399 = vpack.c.b16 %v369, %v368
    %v400 = vpack.c.b16 %v371, %v370
    %v401 = vpack.c.b16 %v373, %v372
    %v402 = vpack.c.b16 %v375, %v374
    %v403 = vpack.c.b16 %v377, %v376
    %v404 = vpack.c.b16 %v379, %v378
    %v405 = vpack.c.b16 %v381, %v380
    %430 = vmatprep.subr.bf16.mxu0 0
    %431 = vmatpush1.bf16.msra.mxu0 %v382
    %432 = vmatprep.subr.bf16.mxu0 0
    %433 = vmatpush1.bf16.msra.mxu0 %v383
    %434 = vmatprep.subr.bf16.mxu0 0
    %435 = vmatpush1.bf16.msra.mxu0 %v384
    %436 = vmatprep.subr.bf16.mxu0 0
    %437 = vmatpush1.bf16.msra.mxu0 %v385
    %438 = vmatprep.subr.bf16.mxu0 0
    %439 = vmatpush1.bf16.msra.mxu0 %v386
    %440 = vmatprep.subr.bf16.mxu0 0
    %441 = vmatpush1.bf16.msra.mxu0 %v387
    %442 = vmatprep.subr.bf16.mxu0 0
    %443 = vmatpush1.bf16.msra.mxu0 %v388
    %444 = vmatprep.subr.bf16.mxu0 0
    %445 = vmatpush1.bf16.msra.mxu0 %v389
    %446 = vmatprep.subr.bf16.mxu0 0
    %447 = vmatpush1.bf16.msra.mxu0 %v390
    %448 = vmatprep.subr.bf16.mxu0 0
    %449 = vmatpush1.bf16.msra.mxu0 %v391
    %450 = vmatprep.subr.bf16.mxu0 0
    %451 = vmatpush1.bf16.msra.mxu0 %v392
    %452 = vmatprep.subr.bf16.mxu0 0
    %453 = vmatpush1.bf16.msra.mxu0 %v393
    %454 = vmatprep.subr.bf16.mxu0 0
    %455 = vmatpush1.bf16.msra.mxu0 %v394
    %456 = vmatprep.subr.bf16.mxu0 0
    %457 = vmatpush1.bf16.msra.mxu0 %v395
    %458 = vmatprep.subr.bf16.mxu0 0
    %459 = vmatpush1.bf16.msra.mxu0 %v396
    %460 = vmatprep.subr.bf16.mxu0 0
    %461 = vmatpush1.bf16.msra.mxu0 %v397
    %462 = vmatprep.mubr.bf16.mxu0 %v229
    %463 = vmatmul.mubr.bf16.gmra.mrb[0].mxu0 %v228
    %v464 = vpop.f32.mrb[0].mxu0
    %v465 = vadd.f32 %v284, %v464
    %v466 = vpop.f32.mrb[0].mxu0
    %v467 = vpop.f32.mrb[0].mxu0
    %v468 = vadd.f32 %v284, %v467
    %v469 = vpop.f32.mrb[0].mxu0
    %470 = vdwg.mxu0
    %471 = vmatprep.subr.bf16.mxu0 0
    %472 = vmatpush1.bf16.msra.mxu0 %v398
    %473 = vmatprep.subr.bf16.mxu0 0
    %474 = vmatpush1.bf16.msra.mxu0 %v399
    %475 = vmatprep.subr.bf16.mxu0 0
    %476 = vmatpush1.bf16.msra.mxu0 %v400
    %477 = vmatprep.subr.bf16.mxu0 0
    %478 = vmatpush1.bf16.msra.mxu0 %v401
    %479 = vmatprep.subr.bf16.mxu0 0
    %480 = vmatpush1.bf16.msra.mxu0 %v402
    %481 = vmatprep.subr.bf16.mxu0 0
    %482 = vmatpush1.bf16.msra.mxu0 %v403
    %483 = vmatprep.subr.bf16.mxu0 0
    %484 = vmatpush1.bf16.msra.mxu0 %v404
    %485 = vmatprep.subr.bf16.mxu0 0
    %486 = vmatpush1.bf16.msra.mxu0 %v405
    %487 = vmatprep.subr.bf16.mxu0 0
    %488 = vmatpush1.bf16.msra.mxu0 0
    %489 = vmatprep.subr.bf16.mxu0 0
    %490 = vmatpush1.bf16.msra.mxu0 0
    %491 = vmatprep.subr.bf16.mxu0 0
    %492 = vmatpush1.bf16.msra.mxu0 0
    %493 = vmatprep.subr.bf16.mxu0 0
    %494 = vmatpush1.bf16.msra.mxu0 0
    %495 = vmatprep.subr.bf16.mxu0 0
    %496 = vmatpush1.bf16.msra.mxu0 0
    %497 = vmatprep.subr.bf16.mxu0 0
    %498 = vmatpush1.bf16.msra.mxu0 0
    %499 = vmatprep.subr.bf16.mxu0 0
    %500 = vmatpush1.bf16.msra.mxu0 0
    %501 = vmatprep.subr.bf16.mxu0 0
    %502 = vmatpush1.bf16.msra.mxu0 0
    %503 = vmatprep.mubr.bf16.mxu0 0
    %504 = vmatmul.mubr.bf16.gmra.mrb[0].mxu0 %v230
    %v505 = vpop.f32.mrb[0].mxu0
    %v506 = vadd.f32 %v465, %v505
    %v507 = vpop.f32.mrb[0].mxu0
    %v508 = vpop.f32.mrb[0].mxu0
    %v509 = vadd.f32 %v468, %v508
    %v510 = vpop.f32.mrb[0].mxu0
    %511 = vdwg.mxu0
    %v512 = vmax.f32 %v506, 0.0
    %v513 = vmax.f32 %v509, 0.0
    %v514 = vpack.c.bf16 %v513, %v512
    %v515 = vld [vmem:[%s5] sm:$0xf]
    %v516 = vld [vmem:[%s5 + $0x4] sm:$0xf]
    %v517 = vld [vmem:[%s5 + $0x8] sm:$0xf]
    %v518 = vld [vmem:[%s5 + $0xc] sm:$0xf]
    %v519 = vld [vmem:[%s5 + $0x10] sm:$0xf]
    %v520 = vld [vmem:[%s5 + $0x14] sm:$0xf]
    %v521 = vld [vmem:[%s5 + $0x18] sm:$0xf]
    %v522 = vld [vmem:[%s5 + $0x1c] sm:$0xf]
    %v523 = vld [vmem:[%s5 + $0x20] sm:$0xf]
    %v524 = vld [vmem:[%s5 + $0x24] sm:$0xf]
    %v525 = vld [vmem:[%s5 + $0x28] sm:$0xf]
    %v526 = vld [vmem:[%s5 + $0x2c] sm:$0xf]
    %v527 = vld [vmem:[%s5 + $0x30] sm:$0xf]
    %v528 = vld [vmem:[%s5 + $0x34] sm:$0xf]
    %v529 = vld [vmem:[%s5 + $0x38] sm:$0xf]
    %v530 = vld [vmem:[%s5 + $0x3c] sm:$0xf]
    %v531 = vld [vmem:[%s6] sm:$0x1]
    %v533 = vlaneseq
    %v534 = vshrl.u32 %v533, 7
    %v535 = vsub.s32 0, %v534
    %v536 = vrot.slane %v531, %v535
    %v554 = vunpack.c.l.b16 %v515
    %v555 = vunpack.c.l.b16 %v516
    %v556 = vunpack.c.l.b16 %v517
    %v557 = vunpack.c.l.b16 %v518
    %v558 = vunpack.c.l.b16 %v519
    %v559 = vunpack.c.l.b16 %v520
    %v560 = vunpack.c.l.b16 %v521
    %v561 = vunpack.c.l.b16 %v522
    %v562 = vunpack.c.l.b16 %v523
    %v563 = vunpack.c.l.b16 %v524
    %v564 = vunpack.c.l.b16 %v525
    %v565 = vunpack.c.l.b16 %v526
    %v566 = vunpack.c.l.b16 %v527
    %v567 = vunpack.c.l.b16 %v528
    %v568 = vunpack.c.l.b16 %v529
    %v569 = vunpack.c.l.b16 %v530
    %v570 = vpack.c.b16 %v555, %v554
    %v571 = vpack.c.b16 %v557, %v556
    %v572 = vpack.c.b16 %v559, %v558
    %v573 = vpack.c.b16 %v561, %v560
    %v574 = vpack.c.b16 %v563, %v562
    %v575 = vpack.c.b16 %v565, %v564
    %v576 = vpack.c.b16 %v567, %v566
    %v577 = vpack.c.b16 %v569, %v568
    %586 = vmatprep.subr.bf16.mxu0 0
    %587 = vmatpush1.bf16.msra.mxu0 %v570
    %588 = vmatprep.subr.bf16.mxu0 0
    %589 = vmatpush1.bf16.msra.mxu0 %v571
    %590 = vmatprep.subr.bf16.mxu0 0
    %591 = vmatpush1.bf16.msra.mxu0 %v572
    %592 = vmatprep.subr.bf16.mxu0 0
    %593 = vmatpush1.bf16.msra.mxu0 %v573
    %594 = vmatprep.subr.bf16.mxu0 0
    %595 = vmatpush1.bf16.msra.mxu0 %v574
    %596 = vmatprep.subr.bf16.mxu0 0
    %597 = vmatpush1.bf16.msra.mxu0 %v575
    %598 = vmatprep.subr.bf16.mxu0 0
    %599 = vmatpush1.bf16.msra.mxu0 %v576
    %600 = vmatprep.subr.bf16.mxu0 0
    %601 = vmatpush1.bf16.msra.mxu0 %v577
    %602 = vmatprep.subr.bf16.mxu0 0
    %603 = vmatpush1.bf16.msra.mxu0 0
    %604 = vmatprep.subr.bf16.mxu0 0
    %605 = vmatpush1.bf16.msra.mxu0 0
    %606 = vmatprep.subr.bf16.mxu0 0
    %607 = vmatpush1.bf16.msra.mxu0 0
    %608 = vmatprep.subr.bf16.mxu0 0
    %609 = vmatpush1.bf16.msra.mxu0 0
    %610 = vmatprep.subr.bf16.mxu0 0
    %611 = vmatpush1.bf16.msra.mxu0 0
    %612 = vmatprep.subr.bf16.mxu0 0
    %613 = vmatpush1.bf16.msra.mxu0 0
    %614 = vmatprep.subr.bf16.mxu0 0
    %615 = vmatpush1.bf16.msra.mxu0 0
    %616 = vmatprep.subr.bf16.mxu0 0
    %617 = vmatpush1.bf16.msra.mxu0 0
    %618 = vmatprep.mubr.bf16.mxu0 0
    %619 = vmatmul.mubr.bf16.gmra.mrb[0].mxu0 %v514
    %v620 = vpop.f32.mrb[0].mxu0
    %v621 = vadd.f32 %v536, %v620
    %v622 = vpop.f32.mrb[0].mxu0
    %v623 = vpop.f32.mrb[0].mxu0
    %v624 = vadd.f32 %v536, %v623
    %v625 = vpop.f32.mrb[0].mxu0
    %626 = vdwg.mxu0
    %v627 = vmax.f32 %v621, 0.0
    %v628 = vmax.f32 %v624, 0.0
    %v629 = vpack.c.bf16 %v628, %v627
    %v630 = vld [vmem:[#allocation6] sm:$0xf]
    %v631 = vld [vmem:[#allocation6 + $0x4] sm:$0xf]
    %v632 = vld [vmem:[#allocation6 + $0x8] sm:$0xf]
    %v633 = vld [vmem:[#allocation6 + $0xc] sm:$0xf]
    %v634 = vld [vmem:[#allocation6 + $0x10] sm:$0xf]
    %v635 = vld [vmem:[#allocation6 + $0x14] sm:$0xf]
    %v636 = vld [vmem:[#allocation6 + $0x18] sm:$0xf]
    %v637 = vld [vmem:[#allocation6 + $0x1c] sm:$0xf]
    %v638 = vld [vmem:[#allocation6 + $0x20] sm:$0xf]
    %v639 = vld [vmem:[#allocation6 + $0x24] sm:$0xf]
    %v640 = vld [vmem:[#allocation6 + $0x28] sm:$0xf]
    %v641 = vld [vmem:[#allocation6 + $0x2c] sm:$0xf]
    %v642 = vld [vmem:[#allocation6 + $0x30] sm:$0xf]
    %v643 = vld [vmem:[#allocation6 + $0x34] sm:$0xf]
    %v644 = vld [vmem:[#allocation6 + $0x38] sm:$0xf]
    %v645 = vld [vmem:[#allocation6 + $0x3c] sm:$0xf]
    %v646 = vld [vmem:[%s8] sm:$0x1]
    %v648 = vlaneseq
    %v649 = vshrl.u32 %v648, 7
    %v650 = vsub.s32 0, %v649
    %v651 = vrot.slane %v646, %v650
    %v669 = vunpack.c.l.b16 %v630
    %v670 = vunpack.c.l.b16 %v631
    %v671 = vunpack.c.l.b16 %v632
    %v672 = vunpack.c.l.b16 %v633
    %v673 = vunpack.c.l.b16 %v634
    %v674 = vunpack.c.l.b16 %v635
    %v675 = vunpack.c.l.b16 %v636
    %v676 = vunpack.c.l.b16 %v637
    %v677 = vunpack.c.l.b16 %v638
    %v678 = vunpack.c.l.b16 %v639
    %v679 = vunpack.c.l.b16 %v640
    %v680 = vunpack.c.l.b16 %v641
    %v681 = vunpack.c.l.b16 %v642
    %v682 = vunpack.c.l.b16 %v643
    %v683 = vunpack.c.l.b16 %v644
    %v684 = vunpack.c.l.b16 %v645
    %v685 = vpack.c.b16 %v670, %v669
    %v686 = vpack.c.b16 %v672, %v671
    %v687 = vpack.c.b16 %v674, %v673
    %v688 = vpack.c.b16 %v676, %v675
    %v689 = vpack.c.b16 %v678, %v677
    %v690 = vpack.c.b16 %v680, %v679
    %v691 = vpack.c.b16 %v682, %v681
    %v692 = vpack.c.b16 %v684, %v683
    %701 = vmatprep.subr.bf16.mxu0 0
    %702 = vmatpush1.bf16.msra.mxu0 %v685
    %703 = vmatprep.subr.bf16.mxu0 0
    %704 = vmatpush1.bf16.msra.mxu0 %v686
    %705 = vmatprep.subr.bf16.mxu0 0
    %706 = vmatpush1.bf16.msra.mxu0 %v687
    %707 = vmatprep.subr.bf16.mxu0 0
    %708 = vmatpush1.bf16.msra.mxu0 %v688
    %709 = vmatprep.subr.bf16.mxu0 0
    %710 = vmatpush1.bf16.msra.mxu0 %v689
    %711 = vmatprep.subr.bf16.mxu0 0
    %712 = vmatpush1.bf16.msra.mxu0 %v690
    %713 = vmatprep.subr.bf16.mxu0 0
    %714 = vmatpush1.bf16.msra.mxu0 %v691
    %715 = vmatprep.subr.bf16.mxu0 0
    %716 = vmatpush1.bf16.msra.mxu0 %v692
    %717 = vmatprep.subr.bf16.mxu0 0
    %718 = vmatpush1.bf16.msra.mxu0 0
    %719 = vmatprep.subr.bf16.mxu0 0
    %720 = vmatpush1.bf16.msra.mxu0 0
    %721 = vmatprep.subr.bf16.mxu0 0
    %722 = vmatpush1.bf16.msra.mxu0 0
    %723 = vmatprep.subr.bf16.mxu0 0
    %724 = vmatpush1.bf16.msra.mxu0 0
    %725 = vmatprep.subr.bf16.mxu0 0
    %726 = vmatpush1.bf16.msra.mxu0 0
    %727 = vmatprep.subr.bf16.mxu0 0
    %728 = vmatpush1.bf16.msra.mxu0 0
    %729 = vmatprep.subr.bf16.mxu0 0
    %730 = vmatpush1.bf16.msra.mxu0 0
    %731 = vmatprep.subr.bf16.mxu0 0
    %732 = vmatpush1.bf16.msra.mxu0 0
    %733 = vmatprep.mubr.bf16.mxu0 0
    %734 = vmatmul.mubr.bf16.gmra.mrb[0].mxu0 %v629
    %v735 = vpop.f32.mrb[0].mxu0
    %v736 = vadd.f32 %v651, %v735
    %v737 = vpop.f32.mrb[0].mxu0
    %v738 = vpop.f32.mrb[0].mxu0
    %v739 = vadd.f32 %v651, %v738
    %v740 = vpop.f32.mrb[0].mxu0
    %741 = vdwg.mxu0
    %vm742 = vcmask 7168
    %743 = vst.msk [vmem:[%s9] sm:$0xff] %vm742, %v736
    %744 = vst.msk [vmem:[%s9 + $0x8] sm:$0xff] %vm742, %v739
    // Predicated region
    $region50: #{mlp_regressor_forward.1} parent=1 // pred_check
      _
    $region51: #{mlp_regressor_forward.1} parent=1 // pred_check_branch
      %746 = sbr.rel (0) target = $region53
    $region52: #{mlp_regressor_forward.1} parent=1 // pred_region
      _
    $region53: #{mlp_regressor_forward.1} parent=1 // pred_fallthru
      _
    // Predicated region
    $region54: #{mlp_regressor_forward.1} parent=1 // pred_check
      _
    $region55: #{mlp_regressor_forward.1} parent=1 // pred_check_branch
      %748 = sbr.rel (0) target = $region57
    $region56: #{mlp_regressor_forward.1} parent=1 // pred_region
      _
    $region57: #{mlp_regressor_forward.1} parent=1 // pred_fallthru
      _
    %749 = vsyncpa [#allocation3], 1
    %750 = vsyncpa [#allocation5], 1

</llo_original>
